<compile_context>
chip_gen: v7x
topology: tpu7x:2x2x1
jax: 0.10.0
libtpu: 0.0.40
codegen_flags: <defaults>
</compile_context>

<pallas_src>
import jax
import jax.numpy as jnp
from jax.experimental import pallas as pl
from jax.experimental.pallas import tpu as pltpu


# ------------------------------------------------------------------ kernel --

def _fused_forward_kernel(
    a_ref, x_ref, w1_ref, b1_ref,          # VMEM inputs
    w2_ref, b2_ref, pool_ref, wfc_ref,
    sel_l_ref, sel_r_ref,                   # VMEM one-hot pair selectors
    bfc_ref,                                # SMEM (1,) f32
    o_ref,                                  # VMEM output (num_pairs, 1) f32
):
    f32 = jnp.float32
    bf16 = jnp.bfloat16

    # --- GCN layer 1: relu(A_hat @ (X @ W1) + b1) ---------------------------
    xw1 = jnp.dot(x_ref[...], w1_ref[...], preferred_element_type=f32)
    h1 = jnp.dot(a_ref[...], xw1.astype(bf16), preferred_element_type=f32)
    h1 = jnp.maximum(h1 + b1_ref[...], 0.0).astype(bf16)

    # --- GCN layer 2: A_hat @ (h1 @ W2) + b2 --------------------------------
    xw2 = jnp.dot(h1, w2_ref[...], preferred_element_type=f32)
    h2 = jnp.dot(a_ref[...], xw2.astype(bf16), preferred_element_type=f32)
    h2 = h2 + b2_ref[...]

    # --- global_mean_pool: pooled image embeddings stay in vregs ------------
    emb = jnp.dot(pool_ref[...], h2.astype(bf16), preferred_element_type=f32)

    # --- fc folded into matmuls ----------------------------------------------
    # per-image left/right scores: (num_images, 2)
    s = jnp.dot(emb, wfc_ref[...], preferred_element_type=f32)
    # one-hot pair selection on the MXU; result is already (num_pairs, 1)
    logits = (jnp.dot(sel_l_ref[...], s[:, 0:1], preferred_element_type=f32)
              + jnp.dot(sel_r_ref[...], s[:, 1:2], preferred_element_type=f32)
              + bfc_ref[0])
    o_ref[...] = jax.nn.sigmoid(logits).astype(o_ref.dtype)


# --------------------------------------------------------------------- glue --

def build_gcn_adj(edge_index, num_nodes):
    """Dense symmetric-normalized adjacency with self-loops (PyG gcn_norm)."""
    # TODO(synk): scatter-add adjacency build stays in XLA (no clean Pallas TPU scatter).
    src = edge_index[0]
    dst = edge_index[1]
    loop = jnp.arange(num_nodes, dtype=src.dtype)
    src = jnp.concatenate([src, loop])
    dst = jnp.concatenate([dst, loop])
    deg = jnp.zeros((num_nodes,), jnp.float32).at[dst].add(1.0)
    dinv = jnp.where(deg > 0, 1.0 / jnp.sqrt(deg), 0.0)
    w = dinv[src] * dinv[dst]
    a_hat = jnp.zeros((num_nodes, num_nodes), jnp.float32).at[dst, src].add(w)
    return a_hat


def build_pool_matrix(batch, num_images):
    onehot = (batch[None, :] == jnp.arange(num_images)[:, None]).astype(jnp.float32)
    counts = jnp.maximum(onehot.sum(axis=1, keepdims=True), 1.0)
    return onehot / counts


def place_recognition_gcn(x, edge_index, batch, pairs, params, num_images):
    n = x.shape[0]
    f_in, hidden = params["w1"].shape
    out_dim = params["w2"].shape[1]
    num_pairs = pairs.shape[0]

    a_hat = build_gcn_adj(edge_index, n)
    pool = build_pool_matrix(batch, num_images)

    # bf16 MXU operands for the big streams, f32 accumulation inside the kernel.
    a_bf = a_hat.astype(jnp.bfloat16)
    x_bf = x.astype(jnp.bfloat16)
    w1_bf = params["w1"].astype(jnp.bfloat16)
    w2_bf = params["w2"].astype(jnp.bfloat16)
    pool_bf = pool.astype(jnp.bfloat16)
    b1 = params["b1"].astype(jnp.float32)
    b2 = params["b2"].astype(jnp.float32)

    # fc weight (2*out_dim, 1) -> (out_dim, 2): col 0 = left half, col 1 = right half.
    wfc = jnp.stack(
        [params["w_fc"][:out_dim, 0], params["w_fc"][out_dim:, 0]], axis=1
    ).astype(jnp.float32)
    bfc = params["b_fc"].reshape(1).astype(jnp.float32)

    # One-hot pair selection matrices (exact; replace the in-kernel scalar gather).
    img_ids = jnp.arange(num_images, dtype=jnp.int32)
    pairs_i = pairs.astype(jnp.int32)
    sel_left = (pairs_i[:, 0:1] == img_ids[None, :]).astype(jnp.float32)
    sel_right = (pairs_i[:, 1:2] == img_ids[None, :]).astype(jnp.float32)

    out = pl.pallas_call(
        _fused_forward_kernel,
        out_shape=jax.ShapeDtypeStruct((num_pairs, 1), jnp.float32),
        grid=(1,),
        in_specs=[
            pl.BlockSpec((n, n), lambda i: (0, 0)),                    # A_hat
            pl.BlockSpec((n, f_in), lambda i: (0, 0)),                 # X
            pl.BlockSpec((f_in, hidden), lambda i: (0, 0)),            # W1
            pl.BlockSpec((1, hidden), lambda i: (0, 0)),               # b1
            pl.BlockSpec((hidden, out_dim), lambda i: (0, 0)),         # W2
            pl.BlockSpec((1, out_dim), lambda i: (0, 0)),              # b2
            pl.BlockSpec((num_images, n), lambda i: (0, 0)),           # pool
            pl.BlockSpec((out_dim, 2), lambda i: (0, 0)),              # fc weight
            pl.BlockSpec((num_pairs, num_images), lambda i: (0, 0)),   # sel_left
            pl.BlockSpec((num_pairs, num_images), lambda i: (0, 0)),   # sel_right
            pl.BlockSpec(memory_space=pltpu.MemorySpace.SMEM),         # fc bias
        ],
        out_specs=pl.BlockSpec((num_pairs, 1), lambda i: (0, 0)),
        compiler_params=pltpu.CompilerParams(
            dimension_semantics=("arbitrary",),
        ),
    )(a_bf, x_bf, w1_bf, b1, w2_bf, b2, pool_bf, wfc, sel_left, sel_right, bfc)

    return out


# --------------------------------------------------------------------- main --

if __name__ == "__main__":
    # Small shapes consistent with the module (scaled-down node count,
    # same 256 -> 128 -> 64 feature pipeline, 128-aligned where possible).
    features_per_image = 16
    num_images = 8
    num_nodes = num_images * features_per_image      # 128
    feature_dim = 256
    hidden_dim = 128
    output_dim = 64
    num_pairs = 20                                    # matches the module spec

    key = jax.random.PRNGKey(0)
    k_x, k_e, k_p, k1, k2, k3, k4, k5, k6 = jax.random.split(key, 9)

    x = jax.random.normal(k_x, (num_nodes, feature_dim), jnp.float32)
    edge_index = jax.random.randint(k_e, (2, num_nodes * 3), 0, num_nodes,
                                    dtype=jnp.int32)
    batch = jnp.repeat(jnp.arange(num_images, dtype=jnp.int32),
                       features_per_image)
    pairs = jax.random.randint(k_p, (num_pairs, 2), 0, num_images,
                               dtype=jnp.int32)

    params = {
        "w1": 0.1 * jax.random.normal(k1, (feature_dim, hidden_dim), jnp.float32),
        "b1": 0.1 * jax.random.normal(k2, (1, hidden_dim), jnp.float32),
        "w2": 0.1 * jax.random.normal(k3, (hidden_dim, output_dim), jnp.float32),
        "b2": 0.1 * jax.random.normal(k4, (1, output_dim), jnp.float32),
        "w_fc": 0.1 * jax.random.normal(k5, (2 * output_dim, 1), jnp.float32),
        "b_fc": 0.1 * jax.random.normal(k6, (1, 1), jnp.float32),
    }

    out = place_recognition_gcn(x, edge_index, batch, pairs, params, num_images)
    out = jax.block_until_ready(out)
    assert out.shape == (num_pairs, 1)
    assert bool(jnp.all((out >= 0.0) & (out <= 1.0)))
    print("KERNEL_OK")
</pallas_src>

<mosaic_0001>
module attributes {stable_mosaic.version = 11 : i64} {
  func.func @_fused_forward_kernel(%arg0: i32, %arg1: memref<128x128xbf16, #tpu.memory_space<vmem>>, %arg2: memref<128x256xbf16, #tpu.memory_space<vmem>>, %arg3: memref<256x128xbf16, #tpu.memory_space<vmem>>, %arg4: memref<1x128xf32, #tpu.memory_space<vmem>>, %arg5: memref<128x64xbf16, #tpu.memory_space<vmem>>, %arg6: memref<1x64xf32, #tpu.memory_space<vmem>>, %arg7: memref<8x128xbf16, #tpu.memory_space<vmem>>, %arg8: memref<64x2xf32, #tpu.memory_space<vmem>>, %arg9: memref<20x8xf32, #tpu.memory_space<vmem>>, %arg10: memref<20x8xf32, #tpu.memory_space<vmem>>, %arg11: memref<1xf32, #tpu.memory_space<smem>>, %arg12: memref<20x1xf32, #tpu.memory_space<vmem>>) attributes {dimension_semantics = [#tpu.dimension_semantics<arbitrary>], iteration_bounds = array<i64: 1>, scalar_prefetch = 0 : i64, scratch_operands = 0 : i64, tpu.core_type = #tpu.core_type<tc>, window_params = [{pipeline_mode = #tpu.pipeline_mode<synchronous>, transform_indices = @transform_0, window_bounds = array<i64: 128, 128>}, {pipeline_mode = #tpu.pipeline_mode<synchronous>, transform_indices = @transform_1, window_bounds = array<i64: 128, 256>}, {pipeline_mode = #tpu.pipeline_mode<synchronous>, transform_indices = @transform_2, window_bounds = array<i64: 256, 128>}, {pipeline_mode = #tpu.pipeline_mode<synchronous>, transform_indices = @transform_3, window_bounds = array<i64: 1, 128>}, {pipeline_mode = #tpu.pipeline_mode<synchronous>, transform_indices = @transform_4, window_bounds = array<i64: 128, 64>}, {pipeline_mode = #tpu.pipeline_mode<synchronous>, transform_indices = @transform_5, window_bounds = array<i64: 1, 64>}, {pipeline_mode = #tpu.pipeline_mode<synchronous>, transform_indices = @transform_6, window_bounds = array<i64: 8, 128>}, {pipeline_mode = #tpu.pipeline_mode<synchronous>, transform_indices = @transform_7, window_bounds = array<i64: 64, 2>}, {pipeline_mode = #tpu.pipeline_mode<synchronous>, transform_indices = @transform_8, window_bounds = array<i64: 20, 8>}, {pipeline_mode = #tpu.pipeline_mode<synchronous>, transform_indices = @transform_9, window_bounds = array<i64: 20, 8>}, {transform_indices = @transform_10, window_bounds = array<i64: 1>}, {pipeline_mode = #tpu.pipeline_mode<synchronous>, transform_indices = @transform_11, window_bounds = array<i64: 20, 1>}]} {
    %c0 = arith.constant 0 : index
    %c0_0 = arith.constant 0 : index
    %0 = vector.load %arg2[%c0, %c0_0] : memref<128x256xbf16, #tpu.memory_space<vmem>>, vector<128x256xbf16>
    %c0_1 = arith.constant 0 : index
    %c0_2 = arith.constant 0 : index
    %1 = vector.load %arg3[%c0_1, %c0_2] : memref<256x128xbf16, #tpu.memory_space<vmem>>, vector<256x128xbf16>
    %cst = arith.constant dense<0.000000e+00> : vector<128x128xf32>
    %2 = tpu.matmul %0, %1, %cst {dimension_numbers = #tpu.dot_dimension_numbers<[1], [0], [0], [1], [0, 0, 1, 1], [], []>} : vector<128x256xbf16>, vector<256x128xbf16>, vector<128x128xf32> -> vector<128x128xf32>
    %c0_3 = arith.constant 0 : index
    %c0_4 = arith.constant 0 : index
    %3 = vector.load %arg1[%c0_3, %c0_4] : memref<128x128xbf16, #tpu.memory_space<vmem>>, vector<128x128xbf16>
    %4 = arith.truncf %2 : vector<128x128xf32> to vector<128x128xbf16>
    %cst_5 = arith.constant dense<0.000000e+00> : vector<128x128xf32>
    %5 = tpu.matmul %3, %4, %cst_5 {dimension_numbers = #tpu.dot_dimension_numbers<[1], [0], [0], [1], [0, 0, 1, 1], [], []>} : vector<128x128xbf16>, vector<128x128xbf16>, vector<128x128xf32> -> vector<128x128xf32>
    %c0_6 = arith.constant 0 : index
    %c0_7 = arith.constant 0 : index
    %6 = vector.load %arg4[%c0_6, %c0_7] : memref<1x128xf32, #tpu.memory_space<vmem>>, vector<1x128xf32>
    %7 = vector.broadcast %6 : vector<1x128xf32> to vector<128x128xf32>
    %8 = arith.addf %5, %7 : vector<128x128xf32>
    %cst_8 = arith.constant 0.000000e+00 : f32
    %9 = vector.broadcast %cst_8 : f32 to vector<128x128xf32>
    %10 = arith.maximumf %8, %9 : vector<128x128xf32>
    %11 = arith.truncf %10 : vector<128x128xf32> to vector<128x128xbf16>
    %c0_9 = arith.constant 0 : index
    %c0_10 = arith.constant 0 : index
    %12 = vector.load %arg5[%c0_9, %c0_10] : memref<128x64xbf16, #tpu.memory_space<vmem>>, vector<128x64xbf16>
    %cst_11 = arith.constant dense<0.000000e+00> : vector<128x64xf32>
    %13 = tpu.matmul %11, %12, %cst_11 {dimension_numbers = #tpu.dot_dimension_numbers<[1], [0], [0], [1], [0, 0, 1, 1], [], []>} : vector<128x128xbf16>, vector<128x64xbf16>, vector<128x64xf32> -> vector<128x64xf32>
    %c0_12 = arith.constant 0 : index
    %c0_13 = arith.constant 0 : index
    %14 = vector.load %arg1[%c0_12, %c0_13] : memref<128x128xbf16, #tpu.memory_space<vmem>>, vector<128x128xbf16>
    %15 = arith.truncf %13 : vector<128x64xf32> to vector<128x64xbf16>
    %cst_14 = arith.constant dense<0.000000e+00> : vector<128x64xf32>
    %16 = tpu.matmul %14, %15, %cst_14 {dimension_numbers = #tpu.dot_dimension_numbers<[1], [0], [0], [1], [0, 0, 1, 1], [], []>} : vector<128x128xbf16>, vector<128x64xbf16>, vector<128x64xf32> -> vector<128x64xf32>
    %c0_15 = arith.constant 0 : index
    %c0_16 = arith.constant 0 : index
    %17 = vector.load %arg6[%c0_15, %c0_16] : memref<1x64xf32, #tpu.memory_space<vmem>>, vector<1x64xf32>
    %18 = vector.broadcast %17 : vector<1x64xf32> to vector<128x64xf32>
    %19 = arith.addf %16, %18 : vector<128x64xf32>
    %c0_17 = arith.constant 0 : index
    %c0_18 = arith.constant 0 : index
    %20 = vector.load %arg7[%c0_17, %c0_18] : memref<8x128xbf16, #tpu.memory_space<vmem>>, vector<8x128xbf16>
    %21 = arith.truncf %19 : vector<128x64xf32> to vector<128x64xbf16>
    %cst_19 = arith.constant dense<0.000000e+00> : vector<8x64xf32>
    %22 = tpu.matmul %20, %21, %cst_19 {dimension_numbers = #tpu.dot_dimension_numbers<[1], [0], [0], [1], [0, 0, 1, 1], [], []>} : vector<8x128xbf16>, vector<128x64xbf16>, vector<8x64xf32> -> vector<8x64xf32>
    %c0_20 = arith.constant 0 : index
    %c0_21 = arith.constant 0 : index
    %23 = vector.load %arg8[%c0_20, %c0_21] : memref<64x2xf32, #tpu.memory_space<vmem>>, vector<64x2xf32>
    %cst_22 = arith.constant dense<0.000000e+00> : vector<8x2xf32>
    %24 = tpu.matmul %22, %23, %cst_22 {dimension_numbers = #tpu.dot_dimension_numbers<[1], [0], [0], [1], [0, 0, 1, 1], [], []>} : vector<8x64xf32>, vector<64x2xf32>, vector<8x2xf32> -> vector<8x2xf32>
    %c0_23 = arith.constant 0 : index
    %c0_24 = arith.constant 0 : index
    %25 = vector.load %arg9[%c0_23, %c0_24] : memref<20x8xf32, #tpu.memory_space<vmem>>, vector<20x8xf32>
    %26 = vector.extract_strided_slice %24 {offsets = [0, 0], sizes = [8, 1], strides = [1, 1]} : vector<8x2xf32> to vector<8x1xf32>
    %cst_25 = arith.constant dense<0.000000e+00> : vector<20x1xf32>
    %27 = tpu.matmul %25, %26, %cst_25 {dimension_numbers = #tpu.dot_dimension_numbers<[1], [0], [0], [1], [0, 0, 1, 1], [], []>} : vector<20x8xf32>, vector<8x1xf32>, vector<20x1xf32> -> vector<20x1xf32>
    %c0_26 = arith.constant 0 : index
    %c0_27 = arith.constant 0 : index
    %28 = vector.load %arg10[%c0_26, %c0_27] : memref<20x8xf32, #tpu.memory_space<vmem>>, vector<20x8xf32>
    %29 = vector.extract_strided_slice %24 {offsets = [0, 1], sizes = [8, 1], strides = [1, 1]} : vector<8x2xf32> to vector<8x1xf32>
    %cst_28 = arith.constant dense<0.000000e+00> : vector<20x1xf32>
    %30 = tpu.matmul %28, %29, %cst_28 {dimension_numbers = #tpu.dot_dimension_numbers<[1], [0], [0], [1], [0, 0, 1, 1], [], []>} : vector<20x8xf32>, vector<8x1xf32>, vector<20x1xf32> -> vector<20x1xf32>
    %31 = arith.addf %27, %30 : vector<20x1xf32>
    %c0_29 = arith.constant 0 : index
    %32 = memref.load %arg11[%c0_29] : memref<1xf32, #tpu.memory_space<smem>>
    %33 = vector.broadcast %32 : f32 to vector<20x1xf32>
    %34 = arith.addf %31, %33 : vector<20x1xf32>
    %35 = arith.negf %34 : vector<20x1xf32>
    %36 = math.exp %35 : vector<20x1xf32>
    %cst_30 = arith.constant 1.000000e+00 : f32
    %37 = vector.broadcast %cst_30 : f32 to vector<20x1xf32>
    %38 = arith.addf %37, %36 : vector<20x1xf32>
    %39 = arith.divf %37, %38 : vector<20x1xf32>
    %c0_31 = arith.constant 0 : index
    %c0_32 = arith.constant 0 : index
    %40 = vector.load %arg12[%c0_31, %c0_32] : memref<20x1xf32, #tpu.memory_space<vmem>>, vector<20x1xf32>
    tpu.vector_store %arg12[%c0_31, %c0_32], %39 {strides = array<i32>} : memref<20x1xf32, #tpu.memory_space<vmem>>, vector<20x1xf32>,
    return
  }
  func.func @transform_0(%arg0: i32) -> (i32, i32) {
    %c0_i32 = arith.constant 0 : i32
    %c0_i32_0 = arith.constant 0 : i32
    %c0_i32_1 = arith.constant 0 : i32
    return %c0_i32, %c0_i32_0 : i32, i32
  }
  func.func @transform_1(%arg0: i32) -> (i32, i32) {
    %c0_i32 = arith.constant 0 : i32
    %c0_i32_0 = arith.constant 0 : i32
    %c0_i32_1 = arith.constant 0 : i32
    return %c0_i32, %c0_i32_0 : i32, i32
  }
  func.func @transform_2(%arg0: i32) -> (i32, i32) {
    %c0_i32 = arith.constant 0 : i32
    %c0_i32_0 = arith.constant 0 : i32
    %c0_i32_1 = arith.constant 0 : i32
    return %c0_i32, %c0_i32_0 : i32, i32
  }
  func.func @transform_3(%arg0: i32) -> (i32, i32) {
    %c0_i32 = arith.constant 0 : i32
    %c0_i32_0 = arith.constant 0 : i32
    %c0_i32_1 = arith.constant 0 : i32
    return %c0_i32, %c0_i32_0 : i32, i32
  }
  func.func @transform_4(%arg0: i32) -> (i32, i32) {
    %c0_i32 = arith.constant 0 : i32
    %c0_i32_0 = arith.constant 0 : i32
    %c0_i32_1 = arith.constant 0 : i32
    return %c0_i32, %c0_i32_0 : i32, i32
  }
  func.func @transform_5(%arg0: i32) -> (i32, i32) {
    %c0_i32 = arith.constant 0 : i32
    %c0_i32_0 = arith.constant 0 : i32
    %c0_i32_1 = arith.constant 0 : i32
    return %c0_i32, %c0_i32_0 : i32, i32
  }
  func.func @transform_6(%arg0: i32) -> (i32, i32) {
    %c0_i32 = arith.constant 0 : i32
    %c0_i32_0 = arith.constant 0 : i32
    %c0_i32_1 = arith.constant 0 : i32
    return %c0_i32, %c0_i32_0 : i32, i32
  }
  func.func @transform_7(%arg0: i32) -> (i32, i32) {
    %c0_i32 = arith.constant 0 : i32
    %c0_i32_0 = arith.constant 0 : i32
    %c0_i32_1 = arith.constant 0 : i32
    return %c0_i32, %c0_i32_0 : i32, i32
  }
  func.func @transform_8(%arg0: i32) -> (i32, i32) {
    %c0_i32 = arith.constant 0 : i32
    %c0_i32_0 = arith.constant 0 : i32
    %c0_i32_1 = arith.constant 0 : i32
    return %c0_i32, %c0_i32_0 : i32, i32
  }
  func.func @transform_9(%arg0: i32) -> (i32, i32) {
    %c0_i32 = arith.constant 0 : i32
    %c0_i32_0 = arith.constant 0 : i32
    %c0_i32_1 = arith.constant 0 : i32
    return %c0_i32, %c0_i32_0 : i32, i32
  }
  func.func @transform_10(%arg0: i32) -> i32 {
    %c0_i32 = arith.constant 0 : i32
    %c0_i32_0 = arith.constant 0 : i32
    return %c0_i32 : i32
  }
  func.func @transform_11(%arg0: i32) -> (i32, i32) {
    %c0_i32 = arith.constant 0 : i32
    %c0_i32_0 = arith.constant 0 : i32
    %c0_i32_1 = arith.constant 0 : i32
    return %c0_i32, %c0_i32_0 : i32, i32
  }
}

</mosaic_0001>

<llo_original>
// kernel: tpu_custom_call.1
$region0: #{tpu_custom_call.1}
  #allocation0 [shape = 'u32[]', space=smem, size = 0x4, offset = 0x4, fixed_abs, tag = 'smem constant byte address 0x4 - core index']
  #allocation1 [shape = 'u32[144,128]{1,0:T(1,128)}', space=vmem, size = 0x12000, scoped, tag = 'internal scratch']
  #allocation2 [shape = 'f32[1]{0:T(128)S(6)}', space=smem, size = 0x200, scoped, tag = 'scoped memory for tpu_custom_call.1']
  %s0 = inlined_call_operand.vmem [shape: bf16[128,128], index: 0, kind: input, shape index: {}]
  %s1 = inlined_call_operand.vmem [shape: bf16[128,256], index: 1, kind: input, shape index: {}]
  %s2 = inlined_call_operand.hbm [shape: bf16[256,128], index: 2, kind: input, shape index: {}]
  %s3 = inlined_call_operand.hbm [shape: f32[1,128], index: 3, kind: input, shape index: {}]
  %s4 = inlined_call_operand.vmem [shape: bf16[128,64], index: 4, kind: input, shape index: {}]
  %s5 = inlined_call_operand.vmem [shape: f32[1,64], index: 5, kind: input, shape index: {}]
  %s6 = inlined_call_operand.vmem [shape: bf16[8,128], index: 6, kind: input, shape index: {}]
  %s7 = inlined_call_operand.vmem [shape: f32[64,2], index: 7, kind: input, shape index: {}]
  %s8 = inlined_call_operand.vmem [shape: f32[20,8], index: 8, kind: input, shape index: {}]
  %s9 = inlined_call_operand.vmem [shape: f32[20,8], index: 9, kind: input, shape index: {}]
  %s10 = inlined_call_operand.<no memory space> [shape: f32[1], index: 10, kind: input, shape index: {}]
  %s11 = inlined_call_operand.vmem [shape: f32[20,1], index: 11, kind: output, shape index: {}]
  %s12 = sld [smem:[#allocation0]]
  $region62: #{tpu_custom_call.1} parent=0
    _
  %s14 = ssub.s32 1, %s12
  %s15 = scalar_select 0, %s14, %s12
  %16 = sst [smem:[#allocation2]] %s10
  $region1: #{tpu_custom_call.1} parent=0
    #allocation3 [shape = 'u8[65536]{0}', space=vmem, size = 0x10000, scoped, tag = 'input window, operand 2, single buffered']
    #allocation4 [shape = 's32[1]{0}', space=sflag, size = 0x4, scoped, tag = 'scoped memory for tpu_custom_call.1']
    #allocation5 [shape = 'u8[512]{0}', space=vmem, size = 0x400, scoped, tag = 'input window, operand 3, single buffered']
    #allocation6 [shape = 's32[1]{0}', space=sflag, size = 0x4, scoped, tag = 'scoped memory for tpu_custom_call.1']
    %17 = vsyncpa [#allocation4], 0
    %18 = vsyncpa [#allocation6], 0
    // Predicated region
    $region2: #{tpu_custom_call.1} parent=1 // pred_check
      _
    $region3: #{tpu_custom_call.1} parent=1 // pred_check_branch
      %20 = sbr.rel (0) target = $region5
    $region4: #{tpu_custom_call.1} parent=1 // pred_region
      _
    $region5: #{tpu_custom_call.1} parent=1 // pred_fallthru
      _
    // Predicated region
    $region6: #{tpu_custom_call.1} parent=1 // pred_check
      _
    $region7: #{tpu_custom_call.1} parent=1 // pred_check_branch
      %22 = sbr.rel (0) target = $region9
    $region8: #{tpu_custom_call.1} parent=1 // pred_region
      _
    $region9: #{tpu_custom_call.1} parent=1 // pred_fallthru
      _
    // Predicated region
    $region10: #{tpu_custom_call.1} parent=1 // pred_check
      _
    $region11: #{tpu_custom_call.1} parent=1 // pred_check_branch
      %24 = sbr.rel (0) target = $region13
    $region12: #{tpu_custom_call.1} parent=1 // pred_region
      %s26 = ssub.s32 2048, 2048
      %27 = vsyncadd [#allocation4], %s26
      %s28 = sshll.u32 [#allocation3], 4
      %s29 = int_to_ptr.vmem [resolvable:$true] %s28
      %34 = dma.hbm_to_vmem [thread:$0]  %s2, 2048, %s29, [#allocation4], 64, 64, 4
    $region13: #{tpu_custom_call.1} parent=1 // pred_fallthru
      _
    // Predicated region
    $region14: #{tpu_custom_call.1} parent=1 // pred_check
      _
    $region15: #{tpu_custom_call.1} parent=1 // pred_check_branch
      %36 = sbr.rel (0) target = $region17
    $region16: #{tpu_custom_call.1} parent=1 // pred_region
      %s38 = ssub.s32 16, 16
      %39 = vsyncadd [#allocation6], %s38
      %s41 = sshll.u32 [#allocation5], 4
      %s42 = int_to_ptr.vmem [resolvable:$true] %s41
      %44 = dma.hbm_to_vmem [thread:$0]  %s3, 16, %s42, [#allocation6]
    $region17: #{tpu_custom_call.1} parent=1 // pred_fallthru
      _
    // Predicated region
    $region18: #{tpu_custom_call.1} parent=1 // pred_check
      _
    $region19: #{tpu_custom_call.1} parent=1 // pred_check_branch
      %46 = sbr.rel (0) target = $region21
    $region20: #{tpu_custom_call.1} parent=1 // pred_region
      _
    $region21: #{tpu_custom_call.1} parent=1 // pred_fallthru
      _
    // Predicated region
    $region22: #{tpu_custom_call.1} parent=1 // pred_check
      _
    $region23: #{tpu_custom_call.1} parent=1 // pred_check_branch
      %48 = sbr.rel (0) target = $region25
    $region24: #{tpu_custom_call.1} parent=1 // pred_region
      _
    $region25: #{tpu_custom_call.1} parent=1 // pred_fallthru
      _
    // Predicated region
    $region26: #{tpu_custom_call.1} parent=1 // pred_check
      _
    $region27: #{tpu_custom_call.1} parent=1 // pred_check_branch
      %50 = sbr.rel (0) target = $region29
    $region28: #{tpu_custom_call.1} parent=1 // pred_region
      _
    $region29: #{tpu_custom_call.1} parent=1 // pred_fallthru
      _
    // Predicated region
    $region30: #{tpu_custom_call.1} parent=1 // pred_check
      _
    $region31: #{tpu_custom_call.1} parent=1 // pred_check_branch
      %52 = sbr.rel (0) target = $region33
    $region32: #{tpu_custom_call.1} parent=1 // pred_region
      _
    $region33: #{tpu_custom_call.1} parent=1 // pred_fallthru
      _
    // Predicated region
    $region34: #{tpu_custom_call.1} parent=1 // pred_check
      _
    $region35: #{tpu_custom_call.1} parent=1 // pred_check_branch
      %54 = sbr.rel (0) target = $region37
    $region36: #{tpu_custom_call.1} parent=1 // pred_region
      _
    $region37: #{tpu_custom_call.1} parent=1 // pred_fallthru
      _
    // Predicated region
    $region38: #{tpu_custom_call.1} parent=1 // pred_check
      _
    $region39: #{tpu_custom_call.1} parent=1 // pred_check_branch
      %56 = sbr.rel (0) target = $region41
    $region40: #{tpu_custom_call.1} parent=1 // pred_region
      _
    $region41: #{tpu_custom_call.1} parent=1 // pred_fallthru
      _
    // Predicated region
    $region42: #{tpu_custom_call.1} parent=1 // pred_check
      _
    $region43: #{tpu_custom_call.1} parent=1 // pred_check_branch
      %58 = sbr.rel (0) target = $region45
    $region44: #{tpu_custom_call.1} parent=1 // pred_region
      _
    $region45: #{tpu_custom_call.1} parent=1 // pred_fallthru
      _
    // Predicated region
    $region46: #{tpu_custom_call.1} parent=1 // pred_check
      _
    $region47: #{tpu_custom_call.1} parent=1 // pred_check_branch
      %60 = sbr.rel (0) target = $region49
    $region48: #{tpu_custom_call.1} parent=1 // pred_region
      %61 = dma.done [#allocation4], 2048
    $region49: #{tpu_custom_call.1} parent=1 // pred_fallthru
      _
    // Predicated region
    $region50: #{tpu_custom_call.1} parent=1 // pred_check
      _
    $region51: #{tpu_custom_call.1} parent=1 // pred_check_branch
      %63 = sbr.rel (0) target = $region53
    $region52: #{tpu_custom_call.1} parent=1 // pred_region
      %64 = dma.done [#allocation6], 16
    $region53: #{tpu_custom_call.1} parent=1 // pred_fallthru
      _
    %v66 = vld [vmem:[%s1] sm:$0xff]
    %v67 = vld [vmem:[%s1 + $0x8] sm:$0xff]
    %v68 = vld [vmem:[%s1 + $0x10] sm:$0xff]
    %v69 = vld [vmem:[%s1 + $0x18] sm:$0xff]
    %v70 = vld [vmem:[%s1 + $0x20] sm:$0xff]
    %v71 = vld [vmem:[%s1 + $0x28] sm:$0xff]
    %v72 = vld [vmem:[%s1 + $0x30] sm:$0xff]
    %v73 = vld [vmem:[%s1 + $0x38] sm:$0xff]
    %v74 = vld [vmem:[%s1 + $0x40] sm:$0xff]
    %v75 = vld [vmem:[%s1 + $0x48] sm:$0xff]
    %v76 = vld [vmem:[%s1 + $0x50] sm:$0xff]
    %v77 = vld [vmem:[%s1 + $0x58] sm:$0xff]
    %v78 = vld [vmem:[%s1 + $0x60] sm:$0xff]
    %v79 = vld [vmem:[%s1 + $0x68] sm:$0xff]
    %v80 = vld [vmem:[%s1 + $0x70] sm:$0xff]
    %v81 = vld [vmem:[%s1 + $0x78] sm:$0xff]
    %v82 = vld [vmem:[#allocation3] sm:$0xf]
    %v83 = vld [vmem:[#allocation3 + $0x4] sm:$0xf]
    %v84 = vld [vmem:[#allocation3 + $0x8] sm:$0xf]
    %v85 = vld [vmem:[#allocation3 + $0xc] sm:$0xf]
    %v86 = vld [vmem:[#allocation3 + $0x10] sm:$0xf]
    %v87 = vld [vmem:[#allocation3 + $0x14] sm:$0xf]
    %v88 = vld [vmem:[#allocation3 + $0x18] sm:$0xf]
    %v89 = vld [vmem:[#allocation3 + $0x1c] sm:$0xf]
    %v90 = vld [vmem:[#allocation3 + $0x20] sm:$0xf]
    %v91 = vld [vmem:[#allocation3 + $0x24] sm:$0xf]
    %v92 = vld [vmem:[#allocation3 + $0x28] sm:$0xf]
    %v93 = vld [vmem:[#allocation3 + $0x2c] sm:$0xf]
    %v94 = vld [vmem:[#allocation3 + $0x30] sm:$0xf]
    %v95 = vld [vmem:[#allocation3 + $0x34] sm:$0xf]
    %v96 = vld [vmem:[#allocation3 + $0x38] sm:$0xf]
    %v97 = vld [vmem:[#allocation3 + $0x3c] sm:$0xf]
    %v98 = vld [vmem:[#allocation3 + $0x40] sm:$0xf]
    %v99 = vld [vmem:[#allocation3 + $0x44] sm:$0xf]
    %v100 = vld [vmem:[#allocation3 + $0x48] sm:$0xf]
    %v101 = vld [vmem:[#allocation3 + $0x4c] sm:$0xf]
    %v102 = vld [vmem:[#allocation3 + $0x50] sm:$0xf]
    %v103 = vld [vmem:[#allocation3 + $0x54] sm:$0xf]
    %v104 = vld [vmem:[#allocation3 + $0x58] sm:$0xf]
    %v105 = vld [vmem:[#allocation3 + $0x5c] sm:$0xf]
    %v106 = vld [vmem:[#allocation3 + $0x60] sm:$0xf]
    %v107 = vld [vmem:[#allocation3 + $0x64] sm:$0xf]
    %v108 = vld [vmem:[#allocation3 + $0x68] sm:$0xf]
    %v109 = vld [vmem:[#allocation3 + $0x6c] sm:$0xf]
    %v110 = vld [vmem:[#allocation3 + $0x70] sm:$0xf]
    %v111 = vld [vmem:[#allocation3 + $0x74] sm:$0xf]
    %v112 = vld [vmem:[#allocation3 + $0x78] sm:$0xf]
    %v113 = vld [vmem:[#allocation3 + $0x7c] sm:$0xf]
    %v130 = vunpack.c.l.b16 %v66
    %v131 = vunpack.c.h.b16 %v66
    %v132 = vunpack.c.l.b16 %v67
    %v133 = vunpack.c.h.b16 %v67
    %v134 = vunpack.c.l.b16 %v68
    %v135 = vunpack.c.h.b16 %v68
    %v136 = vunpack.c.l.b16 %v69
    %v137 = vunpack.c.h.b16 %v69
    %v138 = vunpack.c.l.b16 %v70
    %v139 = vunpack.c.h.b16 %v70
    %v140 = vunpack.c.l.b16 %v71
    %v141 = vunpack.c.h.b16 %v71
    %v142 = vunpack.c.l.b16 %v72
    %v143 = vunpack.c.h.b16 %v72
    %v144 = vunpack.c.l.b16 %v73
    %v145 = vunpack.c.h.b16 %v73
    %v146 = vunpack.c.l.b16 %v74
    %v147 = vunpack.c.h.b16 %v74
    %v148 = vunpack.c.l.b16 %v75
    %v149 = vunpack.c.h.b16 %v75
    %v150 = vunpack.c.l.b16 %v76
    %v151 = vunpack.c.h.b16 %v76
    %v152 = vunpack.c.l.b16 %v77
    %v153 = vunpack.c.h.b16 %v77
    %v154 = vunpack.c.l.b16 %v78
    %v155 = vunpack.c.h.b16 %v78
    %v156 = vunpack.c.l.b16 %v79
    %v157 = vunpack.c.h.b16 %v79
    %v158 = vunpack.c.l.b16 %v80
    %v159 = vunpack.c.h.b16 %v80
    %v160 = vunpack.c.l.b16 %v81
    %v161 = vunpack.c.h.b16 %v81
    %v162 = vpack.c.b16 %v132, %v130
    %v163 = vpack.c.b16 %v133, %v131
    %v164 = vpack.c.b16 %v136, %v134
    %v165 = vpack.c.b16 %v137, %v135
    %v166 = vpack.c.b16 %v140, %v138
    %v167 = vpack.c.b16 %v141, %v139
    %v168 = vpack.c.b16 %v144, %v142
    %v169 = vpack.c.b16 %v145, %v143
    %v170 = vpack.c.b16 %v148, %v146
    %v171 = vpack.c.b16 %v149, %v147
    %v172 = vpack.c.b16 %v152, %v150
    %v173 = vpack.c.b16 %v153, %v151
    %v174 = vpack.c.b16 %v156, %v154
    %v175 = vpack.c.b16 %v157, %v155
    %v176 = vpack.c.b16 %v160, %v158
    %v177 = vpack.c.b16 %v161, %v159
    %v226 = vunpack.c.l.b16 %v82
    %v227 = vunpack.c.l.b16 %v83
    %v228 = vunpack.c.l.b16 %v84
    %v229 = vunpack.c.l.b16 %v85
    %v230 = vunpack.c.l.b16 %v86
    %v231 = vunpack.c.l.b16 %v87
    %v232 = vunpack.c.l.b16 %v88
    %v233 = vunpack.c.l.b16 %v89
    %v234 = vunpack.c.l.b16 %v90
    %v235 = vunpack.c.l.b16 %v91
    %v236 = vunpack.c.l.b16 %v92
    %v237 = vunpack.c.l.b16 %v93
    %v238 = vunpack.c.l.b16 %v94
    %v239 = vunpack.c.l.b16 %v95
    %v240 = vunpack.c.l.b16 %v96
    %v241 = vunpack.c.l.b16 %v97
    %v242 = vunpack.c.l.b16 %v98
    %v243 = vunpack.c.l.b16 %v99
    %v244 = vunpack.c.l.b16 %v100
    %v245 = vunpack.c.l.b16 %v101
    %v246 = vunpack.c.l.b16 %v102
    %v247 = vunpack.c.l.b16 %v103
    %v248 = vunpack.c.l.b16 %v104
    %v249 = vunpack.c.l.b16 %v105
    %v250 = vunpack.c.l.b16 %v106
    %v251 = vunpack.c.l.b16 %v107
    %v252 = vunpack.c.l.b16 %v108
    %v253 = vunpack.c.l.b16 %v109
    %v254 = vunpack.c.l.b16 %v110
    %v255 = vunpack.c.l.b16 %v111
    %v256 = vunpack.c.l.b16 %v112
    %v257 = vunpack.c.l.b16 %v113
    %v258 = vpack.c.b16 %v227, %v226
    %v259 = vpack.c.b16 %v229, %v228
    %v260 = vpack.c.b16 %v231, %v230
    %v261 = vpack.c.b16 %v233, %v232
    %v262 = vpack.c.b16 %v235, %v234
    %v263 = vpack.c.b16 %v237, %v236
    %v264 = vpack.c.b16 %v239, %v238
    %v265 = vpack.c.b16 %v241, %v240
    %v266 = vpack.c.b16 %v243, %v242
    %v267 = vpack.c.b16 %v245, %v244
    %v268 = vpack.c.b16 %v247, %v246
    %v269 = vpack.c.b16 %v249, %v248
    %v270 = vpack.c.b16 %v251, %v250
    %v271 = vpack.c.b16 %v253, %v252
    %v272 = vpack.c.b16 %v255, %v254
    %v273 = vpack.c.b16 %v257, %v256
    %290 = vmatprep.subr.bf16.mxu0 0
    %291 = vmatpush1.bf16.msra.mxu0 %v258
    %292 = vmatprep.subr.bf16.mxu0 0
    %293 = vmatpush1.bf16.msra.mxu0 %v259
    %294 = vmatprep.subr.bf16.mxu0 0
    %295 = vmatpush1.bf16.msra.mxu0 %v260
    %296 = vmatprep.subr.bf16.mxu0 0
    %297 = vmatpush1.bf16.msra.mxu0 %v261
    %298 = vmatprep.subr.bf16.mxu0 0
    %299 = vmatpush1.bf16.msra.mxu0 %v262
    %300 = vmatprep.subr.bf16.mxu0 0
    %301 = vmatpush1.bf16.msra.mxu0 %v263
    %302 = vmatprep.subr.bf16.mxu0 0
    %303 = vmatpush1.bf16.msra.mxu0 %v264
    %304 = vmatprep.subr.bf16.mxu0 0
    %305 = vmatpush1.bf16.msra.mxu0 %v265
    %306 = vmatprep.subr.bf16.mxu0 0
    %307 = vmatpush1.bf16.msra.mxu0 %v266
    %308 = vmatprep.subr.bf16.mxu0 0
    %309 = vmatpush1.bf16.msra.mxu0 %v267
    %310 = vmatprep.subr.bf16.mxu0 0
    %311 = vmatpush1.bf16.msra.mxu0 %v268
    %312 = vmatprep.subr.bf16.mxu0 0
    %313 = vmatpush1.bf16.msra.mxu0 %v269
    %314 = vmatprep.subr.bf16.mxu0 0
    %315 = vmatpush1.bf16.msra.mxu0 %v270
    %316 = vmatprep.subr.bf16.mxu0 0
    %317 = vmatpush1.bf16.msra.mxu0 %v271
    %318 = vmatprep.subr.bf16.mxu0 0
    %319 = vmatpush1.bf16.msra.mxu0 %v272
    %320 = vmatprep.subr.bf16.mxu0 0
    %321 = vmatpush1.bf16.msra.mxu0 %v273
    %322 = vmatprep.mubr.bf16.mxu0 %v163
    %323 = vmatmul.mubr.bf16.gmra.mrb[0].mxu0 %v162
    %v324 = vpop.f32.mrb[0].mxu0
    %v325 = vadd.f32 0.0, %v324
    %v326 = vpop.f32.mrb[0].mxu0
    %v327 = vpop.f32.mrb[0].mxu0
    %v328 = vadd.f32 0.0, %v327
    %v329 = vpop.f32.mrb[0].mxu0
    %330 = vmatprep.mubr.bf16.mxu0 %v165
    %331 = vmatmul.mubr.bf16.gmra.mrb[0].mxu0 %v164
    %v332 = vpop.f32.mrb[0].mxu0
    %v333 = vadd.f32 0.0, %v332
    %v334 = vpop.f32.mrb[0].mxu0
    %v335 = vpop.f32.mrb[0].mxu0
    %v336 = vadd.f32 0.0, %v335
    %v337 = vpop.f32.mrb[0].mxu0
    %338 = vmatprep.mubr.bf16.mxu0 %v167
    %339 = vmatmul.mubr.bf16.gmra.mrb[0].mxu0 %v166
    %v340 = vpop.f32.mrb[0].mxu0
    %v341 = vadd.f32 0.0, %v340
    %v342 = vpop.f32.mrb[0].mxu0
    %v343 = vpop.f32.mrb[0].mxu0
    %v344 = vadd.f32 0.0, %v343
    %v345 = vpop.f32.mrb[0].mxu0
    %346 = vmatprep.mubr.bf16.mxu0 %v169
    %347 = vmatmul.mubr.bf16.gmra.mrb[0].mxu0 %v168
    %v348 = vpop.f32.mrb[0].mxu0
    %v349 = vadd.f32 0.0, %v348
    %v350 = vpop.f32.mrb[0].mxu0
    %v351 = vpop.f32.mrb[0].mxu0
    %v352 = vadd.f32 0.0, %v351
    %v353 = vpop.f32.mrb[0].mxu0
    %354 = vmatprep.mubr.bf16.mxu0 %v171
    %355 = vmatmul.mubr.bf16.gmra.mrb[0].mxu0 %v170
    %v356 = vpop.f32.mrb[0].mxu0
    %v357 = vadd.f32 0.0, %v356
    %v358 = vpop.f32.mrb[0].mxu0
    %v359 = vpop.f32.mrb[0].mxu0
    %v360 = vadd.f32 0.0, %v359
    %v361 = vpop.f32.mrb[0].mxu0
    %362 = vmatprep.mubr.bf16.mxu0 %v173
    %363 = vmatmul.mubr.bf16.gmra.mrb[0].mxu0 %v172
    %v364 = vpop.f32.mrb[0].mxu0
    %v365 = vadd.f32 0.0, %v364
    %v366 = vpop.f32.mrb[0].mxu0
    %v367 = vpop.f32.mrb[0].mxu0
    %v368 = vadd.f32 0.0, %v367
    %v369 = vpop.f32.mrb[0].mxu0
    %370 = vmatprep.mubr.bf16.mxu0 %v175
    %371 = vmatmul.mubr.bf16.gmra.mrb[0].mxu0 %v174
    %v372 = vpop.f32.mrb[0].mxu0
    %v373 = vadd.f32 0.0, %v372
    %v374 = vpop.f32.mrb[0].mxu0
    %v375 = vpop.f32.mrb[0].mxu0
    %v376 = vadd.f32 0.0, %v375
    %v377 = vpop.f32.mrb[0].mxu0
    %378 = vmatprep.mubr.bf16.mxu0 %v177
    %379 = vmatmul.mubr.bf16.gmra.mrb[0].mxu0 %v176
    %v380 = vpop.f32.mrb[0].mxu0
    %v381 = vadd.f32 0.0, %v380
    %v382 = vpop.f32.mrb[0].mxu0
    %v383 = vpop.f32.mrb[0].mxu0
    %v384 = vadd.f32 0.0, %v383
    %v385 = vpop.f32.mrb[0].mxu0
    %386 = vdwg.mxu0
    %v387 = vld [vmem:[%s0] sm:$0xf]
    %v388 = vld [vmem:[%s0 + $0x4] sm:$0xf]
    %v389 = vld [vmem:[%s0 + $0x8] sm:$0xf]
    %v390 = vld [vmem:[%s0 + $0xc] sm:$0xf]
    %v391 = vld [vmem:[%s0 + $0x10] sm:$0xf]
    %v392 = vld [vmem:[%s0 + $0x14] sm:$0xf]
    %v393 = vld [vmem:[%s0 + $0x18] sm:$0xf]
    %v394 = vld [vmem:[%s0 + $0x1c] sm:$0xf]
    %v395 = vld [vmem:[%s0 + $0x20] sm:$0xf]
    %v396 = vld [vmem:[%s0 + $0x24] sm:$0xf]
    %v397 = vld [vmem:[%s0 + $0x28] sm:$0xf]
    %v398 = vld [vmem:[%s0 + $0x2c] sm:$0xf]
    %v399 = vld [vmem:[%s0 + $0x30] sm:$0xf]
    %v400 = vld [vmem:[%s0 + $0x34] sm:$0xf]
    %v401 = vld [vmem:[%s0 + $0x38] sm:$0xf]
    %v402 = vld [vmem:[%s0 + $0x3c] sm:$0xf]
    %v403 = vpack.c.bf16 %v328, %v325
    %v404 = vpack.c.bf16 %v336, %v333
    %v405 = vpack.c.bf16 %v344, %v341
    %v406 = vpack.c.bf16 %v352, %v349
    %v407 = vpack.c.bf16 %v360, %v357
    %v408 = vpack.c.bf16 %v368, %v365
    %v409 = vpack.c.bf16 %v376, %v373
    %v410 = vpack.c.bf16 %v384, %v381
    %v411 = vld [vmem:[#allocation5] sm:$0x1]
    %v413 = vlaneseq
    %v414 = vshrl.u32 %v413, 7
    %v415 = vsub.s32 0, %v414
    %v416 = vrot.slane %v411, %v415
    %v434 = vunpack.c.l.b16 %v387
    %v435 = vunpack.c.l.b16 %v388
    %v436 = vunpack.c.l.b16 %v389
    %v437 = vunpack.c.l.b16 %v390
    %v438 = vunpack.c.l.b16 %v391
    %v439 = vunpack.c.l.b16 %v392
    %v440 = vunpack.c.l.b16 %v393
    %v441 = vunpack.c.l.b16 %v394
    %v442 = vunpack.c.l.b16 %v395
    %v443 = vunpack.c.l.b16 %v396
    %v444 = vunpack.c.l.b16 %v397
    %v445 = vunpack.c.l.b16 %v398
    %v446 = vunpack.c.l.b16 %v399
    %v447 = vunpack.c.l.b16 %v400
    %v448 = vunpack.c.l.b16 %v401
    %v449 = vunpack.c.l.b16 %v402
    %v450 = vpack.c.b16 %v435, %v434
    %v451 = vpack.c.b16 %v437, %v436
    %v452 = vpack.c.b16 %v439, %v438
    %v453 = vpack.c.b16 %v441, %v440
    %v454 = vpack.c.b16 %v443, %v442
    %v455 = vpack.c.b16 %v445, %v444
    %v456 = vpack.c.b16 %v447, %v446
    %v457 = vpack.c.b16 %v449, %v448
    %466 = vmatprep.subr.bf16.mxu0 0
    %467 = vmatpush1.bf16.msra.mxu0 %v403
    %468 = vmatprep.subr.bf16.mxu0 0
    %469 = vmatpush1.bf16.msra.mxu0 %v404
    %470 = vmatprep.subr.bf16.mxu0 0
    %471 = vmatpush1.bf16.msra.mxu0 %v405
    %472 = vmatprep.subr.bf16.mxu0 0
    %473 = vmatpush1.bf16.msra.mxu0 %v406
    %474 = vmatprep.subr.bf16.mxu0 0
    %475 = vmatpush1.bf16.msra.mxu0 %v407
    %476 = vmatprep.subr.bf16.mxu0 0
    %477 = vmatpush1.bf16.msra.mxu0 %v408
    %478 = vmatprep.subr.bf16.mxu0 0
    %479 = vmatpush1.bf16.msra.mxu0 %v409
    %480 = vmatprep.subr.bf16.mxu0 0
    %481 = vmatpush1.bf16.msra.mxu0 %v410
    %482 = vmatprep.subr.bf16.mxu0 0
    %483 = vmatpush1.bf16.msra.mxu0 0
    %484 = vmatprep.subr.bf16.mxu0 0
    %485 = vmatpush1.bf16.msra.mxu0 0
    %486 = vmatprep.subr.bf16.mxu0 0
    %487 = vmatpush1.bf16.msra.mxu0 0
    %488 = vmatprep.subr.bf16.mxu0 0
    %489 = vmatpush1.bf16.msra.mxu0 0
    %490 = vmatprep.subr.bf16.mxu0 0
    %491 = vmatpush1.bf16.msra.mxu0 0
    %492 = vmatprep.subr.bf16.mxu0 0
    %493 = vmatpush1.bf16.msra.mxu0 0
    %494 = vmatprep.subr.bf16.mxu0 0
    %495 = vmatpush1.bf16.msra.mxu0 0
    %496 = vmatprep.subr.bf16.mxu0 0
    %497 = vmatpush1.bf16.msra.mxu0 0
    %498 = vmatprep.mubr.bf16.mxu0 0
    %499 = vmatmul.mubr.bf16.gmra.mrb[0].mxu0 %v450
    %v500 = vpop.f32.mrb[0].mxu0
    %v501 = vadd.f32 %v416, %v500
    %v502 = vpop.f32.mrb[0].mxu0
    %v503 = vpop.f32.mrb[0].mxu0
    %v504 = vadd.f32 %v416, %v503
    %v505 = vpop.f32.mrb[0].mxu0
    %506 = vmatprep.mubr.bf16.mxu0 0
    %507 = vmatmul.mubr.bf16.gmra.mrb[0].mxu0 %v451
    %v508 = vpop.f32.mrb[0].mxu0
    %v509 = vadd.f32 %v416, %v508
    %v510 = vpop.f32.mrb[0].mxu0
    %v511 = vpop.f32.mrb[0].mxu0
    %v512 = vadd.f32 %v416, %v511
    %v513 = vpop.f32.mrb[0].mxu0
    %514 = vmatprep.mubr.bf16.mxu0 0
    %515 = vmatmul.mubr.bf16.gmra.mrb[0].mxu0 %v452
    %v516 = vpop.f32.mrb[0].mxu0
    %v517 = vadd.f32 %v416, %v516
    %v518 = vpop.f32.mrb[0].mxu0
    %v519 = vpop.f32.mrb[0].mxu0
    %v520 = vadd.f32 %v416, %v519
    %v521 = vpop.f32.mrb[0].mxu0
    %522 = vmatprep.mubr.bf16.mxu0 0
    %523 = vmatmul.mubr.bf16.gmra.mrb[0].mxu0 %v453
    %v524 = vpop.f32.mrb[0].mxu0
    %v525 = vadd.f32 %v416, %v524
    %v526 = vpop.f32.mrb[0].mxu0
    %v527 = vpop.f32.mrb[0].mxu0
    %v528 = vadd.f32 %v416, %v527
    %v529 = vpop.f32.mrb[0].mxu0
    %530 = vmatprep.mubr.bf16.mxu0 0
    %531 = vmatmul.mubr.bf16.gmra.mrb[0].mxu0 %v454
    %v532 = vpop.f32.mrb[0].mxu0
    %v533 = vadd.f32 %v416, %v532
    %v534 = vpop.f32.mrb[0].mxu0
    %v535 = vpop.f32.mrb[0].mxu0
    %v536 = vadd.f32 %v416, %v535
    %v537 = vpop.f32.mrb[0].mxu0
    %538 = vmatprep.mubr.bf16.mxu0 0
    %539 = vmatmul.mubr.bf16.gmra.mrb[0].mxu0 %v455
    %v540 = vpop.f32.mrb[0].mxu0
    %v541 = vadd.f32 %v416, %v540
    %v542 = vpop.f32.mrb[0].mxu0
    %v543 = vpop.f32.mrb[0].mxu0
    %v544 = vadd.f32 %v416, %v543
    %v545 = vpop.f32.mrb[0].mxu0
    %546 = vmatprep.mubr.bf16.mxu0 0
    %547 = vmatmul.mubr.bf16.gmra.mrb[0].mxu0 %v456
    %v548 = vpop.f32.mrb[0].mxu0
    %v549 = vadd.f32 %v416, %v548
    %v550 = vpop.f32.mrb[0].mxu0
    %v551 = vpop.f32.mrb[0].mxu0
    %v552 = vadd.f32 %v416, %v551
    %v553 = vpop.f32.mrb[0].mxu0
    %554 = vmatprep.mubr.bf16.mxu0 0
    %555 = vmatmul.mubr.bf16.gmra.mrb[0].mxu0 %v457
    %v556 = vpop.f32.mrb[0].mxu0
    %v557 = vadd.f32 %v416, %v556
    %v558 = vpop.f32.mrb[0].mxu0
    %v559 = vpop.f32.mrb[0].mxu0
    %v560 = vadd.f32 %v416, %v559
    %v561 = vpop.f32.mrb[0].mxu0
    %562 = vdwg.mxu0
    %v563 = vmax.f32 %v501, 0.0
    %v564 = vmax.f32 %v504, 0.0
    %v565 = vmax.f32 %v509, 0.0
    %v566 = vmax.f32 %v512, 0.0
    %v567 = vmax.f32 %v517, 0.0
    %v568 = vmax.f32 %v520, 0.0
    %v569 = vmax.f32 %v525, 0.0
    %v570 = vmax.f32 %v528, 0.0
    %v571 = vmax.f32 %v533, 0.0
    %v572 = vmax.f32 %v536, 0.0
    %v573 = vmax.f32 %v541, 0.0
    %v574 = vmax.f32 %v544, 0.0
    %v575 = vmax.f32 %v549, 0.0
    %v576 = vmax.f32 %v552, 0.0
    %v577 = vmax.f32 %v557, 0.0
    %v578 = vmax.f32 %v560, 0.0
    %v579 = vpack.c.bf16 %v564, %v563
    %v580 = vpack.c.bf16 %v566, %v565
    %v581 = vpack.c.bf16 %v568, %v567
    %v582 = vpack.c.bf16 %v570, %v569
    %v583 = vpack.c.bf16 %v572, %v571
    %v584 = vpack.c.bf16 %v574, %v573
    %v585 = vpack.c.bf16 %v576, %v575
    %v586 = vpack.c.bf16 %v578, %v577
    %v587 = vld [vmem:[%s4] sm:$0xf]
    %v588 = vld [vmem:[%s4 + $0x4] sm:$0xf]
    %v589 = vld [vmem:[%s4 + $0x8] sm:$0xf]
    %v590 = vld [vmem:[%s4 + $0xc] sm:$0xf]
    %v591 = vld [vmem:[%s4 + $0x10] sm:$0xf]
    %v592 = vld [vmem:[%s4 + $0x14] sm:$0xf]
    %v593 = vld [vmem:[%s4 + $0x18] sm:$0xf]
    %v594 = vld [vmem:[%s4 + $0x1c] sm:$0xf]
    %v595 = vld [vmem:[%s4 + $0x20] sm:$0xf]
    %v596 = vld [vmem:[%s4 + $0x24] sm:$0xf]
    %v597 = vld [vmem:[%s4 + $0x28] sm:$0xf]
    %v598 = vld [vmem:[%s4 + $0x2c] sm:$0xf]
    %v599 = vld [vmem:[%s4 + $0x30] sm:$0xf]
    %v600 = vld [vmem:[%s4 + $0x34] sm:$0xf]
    %v601 = vld [vmem:[%s4 + $0x38] sm:$0xf]
    %v602 = vld [vmem:[%s4 + $0x3c] sm:$0xf]
    %v619 = vunpack.c.l.b16 %v587
    %v620 = vunpack.c.l.b16 %v588
    %v621 = vunpack.c.l.b16 %v589
    %v622 = vunpack.c.l.b16 %v590
    %v623 = vunpack.c.l.b16 %v591
    %v624 = vunpack.c.l.b16 %v592
    %v625 = vunpack.c.l.b16 %v593
    %v626 = vunpack.c.l.b16 %v594
    %v627 = vunpack.c.l.b16 %v595
    %v628 = vunpack.c.l.b16 %v596
    %v629 = vunpack.c.l.b16 %v597
    %v630 = vunpack.c.l.b16 %v598
    %v631 = vunpack.c.l.b16 %v599
    %v632 = vunpack.c.l.b16 %v600
    %v633 = vunpack.c.l.b16 %v601
    %v634 = vunpack.c.l.b16 %v602
    %v635 = vpack.c.b16 %v620, %v619
    %v636 = vpack.c.b16 %v622, %v621
    %v637 = vpack.c.b16 %v624, %v623
    %v638 = vpack.c.b16 %v626, %v625
    %v639 = vpack.c.b16 %v628, %v627
    %v640 = vpack.c.b16 %v630, %v629
    %v641 = vpack.c.b16 %v632, %v631
    %v642 = vpack.c.b16 %v634, %v633
    %651 = vmatprep.subr.bf16.mxu0 0
    %652 = vmatpush1.bf16.msra.mxu0 %v635
    %653 = vmatprep.subr.bf16.mxu0 0
    %654 = vmatpush1.bf16.msra.mxu0 %v636
    %655 = vmatprep.subr.bf16.mxu0 0
    %656 = vmatpush1.bf16.msra.mxu0 %v637
    %657 = vmatprep.subr.bf16.mxu0 0
    %658 = vmatpush1.bf16.msra.mxu0 %v638
    %659 = vmatprep.subr.bf16.mxu0 0
    %660 = vmatpush1.bf16.msra.mxu0 %v639
    %661 = vmatprep.subr.bf16.mxu0 0
    %662 = vmatpush1.bf16.msra.mxu0 %v640
    %663 = vmatprep.subr.bf16.mxu0 0
    %664 = vmatpush1.bf16.msra.mxu0 %v641
    %665 = vmatprep.subr.bf16.mxu0 0
    %666 = vmatpush1.bf16.msra.mxu0 %v642
    %667 = vmatprep.subr.bf16.mxu0 0
    %668 = vmatpush1.bf16.msra.mxu0 0
    %669 = vmatprep.subr.bf16.mxu0 0
    %670 = vmatpush1.bf16.msra.mxu0 0
    %671 = vmatprep.subr.bf16.mxu0 0
    %672 = vmatpush1.bf16.msra.mxu0 0
    %673 = vmatprep.subr.bf16.mxu0 0
    %674 = vmatpush1.bf16.msra.mxu0 0
    %675 = vmatprep.subr.bf16.mxu0 0
    %676 = vmatpush1.bf16.msra.mxu0 0
    %677 = vmatprep.subr.bf16.mxu0 0
    %678 = vmatpush1.bf16.msra.mxu0 0
    %679 = vmatprep.subr.bf16.mxu0 0
    %680 = vmatpush1.bf16.msra.mxu0 0
    %681 = vmatprep.subr.bf16.mxu0 0
    %682 = vmatpush1.bf16.msra.mxu0 0
    %683 = vmatprep.mubr.bf16.mxu0 0
    %684 = vmatmul.mubr.bf16.gmra.mrb[0].mxu0 %v579
    %v685 = vpop.f32.mrb[0].mxu0
    %v686 = vadd.f32 0.0, %v685
    %v687 = vpop.f32.mrb[0].mxu0
    %v688 = vpop.f32.mrb[0].mxu0
    %v689 = vadd.f32 0.0, %v688
    %v690 = vpop.f32.mrb[0].mxu0
    %691 = vmatprep.mubr.bf16.mxu0 0
    %692 = vmatmul.mubr.bf16.gmra.mrb[0].mxu0 %v580
    %v693 = vpop.f32.mrb[0].mxu0
    %v694 = vadd.f32 0.0, %v693
    %v695 = vpop.f32.mrb[0].mxu0
    %v696 = vpop.f32.mrb[0].mxu0
    %v697 = vadd.f32 0.0, %v696
    %v698 = vpop.f32.mrb[0].mxu0
    %699 = vmatprep.mubr.bf16.mxu0 0
    %700 = vmatmul.mubr.bf16.gmra.mrb[0].mxu0 %v581
    %v701 = vpop.f32.mrb[0].mxu0
    %v702 = vadd.f32 0.0, %v701
    %v703 = vpop.f32.mrb[0].mxu0
    %v704 = vpop.f32.mrb[0].mxu0
    %v705 = vadd.f32 0.0, %v704
    %v706 = vpop.f32.mrb[0].mxu0
    %707 = vmatprep.mubr.bf16.mxu0 0
    %708 = vmatmul.mubr.bf16.gmra.mrb[0].mxu0 %v582
    %v709 = vpop.f32.mrb[0].mxu0
    %v710 = vadd.f32 0.0, %v709
    %v711 = vpop.f32.mrb[0].mxu0
    %v712 = vpop.f32.mrb[0].mxu0
    %v713 = vadd.f32 0.0, %v712
    %v714 = vpop.f32.mrb[0].mxu0
    %715 = vmatprep.mubr.bf16.mxu0 0
    %716 = vmatmul.mubr.bf16.gmra.mrb[0].mxu0 %v583
    %v717 = vpop.f32.mrb[0].mxu0
    %v718 = vadd.f32 0.0, %v717
    %v719 = vpop.f32.mrb[0].mxu0
    %v720 = vpop.f32.mrb[0].mxu0
    %v721 = vadd.f32 0.0, %v720
    %v722 = vpop.f32.mrb[0].mxu0
    %723 = vmatprep.mubr.bf16.mxu0 0
    %724 = vmatmul.mubr.bf16.gmra.mrb[0].mxu0 %v584
    %v725 = vpop.f32.mrb[0].mxu0
    %v726 = vadd.f32 0.0, %v725
    %v727 = vpop.f32.mrb[0].mxu0
    %v728 = vpop.f32.mrb[0].mxu0
    %v729 = vadd.f32 0.0, %v728
    %v730 = vpop.f32.mrb[0].mxu0
    %731 = vmatprep.mubr.bf16.mxu0 0
    %732 = vmatmul.mubr.bf16.gmra.mrb[0].mxu0 %v585
    %v733 = vpop.f32.mrb[0].mxu0
    %v734 = vadd.f32 0.0, %v733
    %v735 = vpop.f32.mrb[0].mxu0
    %v736 = vpop.f32.mrb[0].mxu0
    %v737 = vadd.f32 0.0, %v736
    %v738 = vpop.f32.mrb[0].mxu0
    %739 = vmatprep.mubr.bf16.mxu0 0
    %740 = vmatmul.mubr.bf16.gmra.mrb[0].mxu0 %v586
    %v741 = vpop.f32.mrb[0].mxu0
    %v742 = vadd.f32 0.0, %v741
    %v743 = vpop.f32.mrb[0].mxu0
    %v744 = vpop.f32.mrb[0].mxu0
    %v745 = vadd.f32 0.0, %v744
    %v746 = vpop.f32.mrb[0].mxu0
    %747 = vdwg.mxu0
    %v748 = vpack.c.bf16 %v689, %v686
    %v749 = vpack.c.bf16 %v697, %v694
    %v750 = vpack.c.bf16 %v705, %v702
    %v751 = vpack.c.bf16 %v713, %v710
    %v752 = vpack.c.bf16 %v721, %v718
    %v753 = vpack.c.bf16 %v729, %v726
    %v754 = vpack.c.bf16 %v737, %v734
    %v755 = vpack.c.bf16 %v745, %v742
    %v756 = vld [vmem:[%s5] sm:$0x1]
    %v758 = vlaneseq
    %v759 = vshrl.u32 %v758, 7
    %v760 = vsub.s32 0, %v759
    %v761 = vrot.slane %v756, %v760
    %763 = vmatprep.subr.bf16.mxu0 0
    %764 = vmatpush1.bf16.msra.mxu0 %v748
    %765 = vmatprep.subr.bf16.mxu0 0
    %766 = vmatpush1.bf16.msra.mxu0 %v749
    %767 = vmatprep.subr.bf16.mxu0 0
    %768 = vmatpush1.bf16.msra.mxu0 %v750
    %769 = vmatprep.subr.bf16.mxu0 0
    %770 = vmatpush1.bf16.msra.mxu0 %v751
    %771 = vmatprep.subr.bf16.mxu0 0
    %772 = vmatpush1.bf16.msra.mxu0 %v752
    %773 = vmatprep.subr.bf16.mxu0 0
    %774 = vmatpush1.bf16.msra.mxu0 %v753
    %775 = vmatprep.subr.bf16.mxu0 0
    %776 = vmatpush1.bf16.msra.mxu0 %v754
    %777 = vmatprep.subr.bf16.mxu0 0
    %778 = vmatpush1.bf16.msra.mxu0 %v755
    %779 = vmatprep.subr.bf16.mxu0 0
    %780 = vmatpush1.bf16.msra.mxu0 0
    %781 = vmatprep.subr.bf16.mxu0 0
    %782 = vmatpush1.bf16.msra.mxu0 0
    %783 = vmatprep.subr.bf16.mxu0 0
    %784 = vmatpush1.bf16.msra.mxu0 0
    %785 = vmatprep.subr.bf16.mxu0 0
    %786 = vmatpush1.bf16.msra.mxu0 0
    %787 = vmatprep.subr.bf16.mxu0 0
    %788 = vmatpush1.bf16.msra.mxu0 0
    %789 = vmatprep.subr.bf16.mxu0 0
    %790 = vmatpush1.bf16.msra.mxu0 0
    %791 = vmatprep.subr.bf16.mxu0 0
    %792 = vmatpush1.bf16.msra.mxu0 0
    %793 = vmatprep.subr.bf16.mxu0 0
    %794 = vmatpush1.bf16.msra.mxu0 0
    %795 = vmatprep.mubr.bf16.mxu0 0
    %796 = vmatmul.mubr.bf16.gmra.mrb[0].mxu0 %v450
    %v797 = vpop.f32.mrb[0].mxu0
    %v798 = vadd.f32 %v761, %v797
    %v799 = vpop.f32.mrb[0].mxu0
    %v800 = vpop.f32.mrb[0].mxu0
    %v801 = vadd.f32 %v761, %v800
    %v802 = vpop.f32.mrb[0].mxu0
    %803 = vmatprep.mubr.bf16.mxu0 0
    %804 = vmatmul.mubr.bf16.gmra.mrb[0].mxu0 %v451
    %v805 = vpop.f32.mrb[0].mxu0
    %v806 = vadd.f32 %v761, %v805
    %v807 = vpop.f32.mrb[0].mxu0
    %v808 = vpop.f32.mrb[0].mxu0
    %v809 = vadd.f32 %v761, %v808
    %v810 = vpop.f32.mrb[0].mxu0
    %811 = vmatprep.mubr.bf16.mxu0 0
    %812 = vmatmul.mubr.bf16.gmra.mrb[0].mxu0 %v452
    %v813 = vpop.f32.mrb[0].mxu0
    %v814 = vadd.f32 %v761, %v813
    %v815 = vpop.f32.mrb[0].mxu0
    %v816 = vpop.f32.mrb[0].mxu0
    %v817 = vadd.f32 %v761, %v816
    %v818 = vpop.f32.mrb[0].mxu0
    %819 = vmatprep.mubr.bf16.mxu0 0
    %820 = vmatmul.mubr.bf16.gmra.mrb[0].mxu0 %v453
    %v821 = vpop.f32.mrb[0].mxu0
    %v822 = vadd.f32 %v761, %v821
    %v823 = vpop.f32.mrb[0].mxu0
    %v824 = vpop.f32.mrb[0].mxu0
    %v825 = vadd.f32 %v761, %v824
    %v826 = vpop.f32.mrb[0].mxu0
    %827 = vmatprep.mubr.bf16.mxu0 0
    %828 = vmatmul.mubr.bf16.gmra.mrb[0].mxu0 %v454
    %v829 = vpop.f32.mrb[0].mxu0
    %v830 = vadd.f32 %v761, %v829
    %v831 = vpop.f32.mrb[0].mxu0
    %v832 = vpop.f32.mrb[0].mxu0
    %v833 = vadd.f32 %v761, %v832
    %v834 = vpop.f32.mrb[0].mxu0
    %835 = vmatprep.mubr.bf16.mxu0 0
    %836 = vmatmul.mubr.bf16.gmra.mrb[0].mxu0 %v455
    %v837 = vpop.f32.mrb[0].mxu0
    %v838 = vadd.f32 %v761, %v837
    %v839 = vpop.f32.mrb[0].mxu0
    %v840 = vpop.f32.mrb[0].mxu0
    %v841 = vadd.f32 %v761, %v840
    %v842 = vpop.f32.mrb[0].mxu0
    %843 = vmatprep.mubr.bf16.mxu0 0
    %844 = vmatmul.mubr.bf16.gmra.mrb[0].mxu0 %v456
    %v845 = vpop.f32.mrb[0].mxu0
    %v846 = vadd.f32 %v761, %v845
    %v847 = vpop.f32.mrb[0].mxu0
    %v848 = vpop.f32.mrb[0].mxu0
    %v849 = vadd.f32 %v761, %v848
    %v850 = vpop.f32.mrb[0].mxu0
    %851 = vmatprep.mubr.bf16.mxu0 0
    %852 = vmatmul.mubr.bf16.gmra.mrb[0].mxu0 %v457
    %v853 = vpop.f32.mrb[0].mxu0
    %v854 = vadd.f32 %v761, %v853
    %v855 = vpop.f32.mrb[0].mxu0
    %v856 = vpop.f32.mrb[0].mxu0
    %v857 = vadd.f32 %v761, %v856
    %v858 = vpop.f32.mrb[0].mxu0
    %859 = vdwg.mxu0
    %v860 = vld [vmem:[%s6] sm:$0xf]
    %v861 = vpack.c.bf16 %v801, %v798
    %v862 = vpack.c.bf16 %v809, %v806
    %v863 = vpack.c.bf16 %v817, %v814
    %v864 = vpack.c.bf16 %v825, %v822
    %v865 = vpack.c.bf16 %v833, %v830
    %v866 = vpack.c.bf16 %v841, %v838
    %v867 = vpack.c.bf16 %v849, %v846
    %v868 = vpack.c.bf16 %v857, %v854
    %869 = vmatprep.subr.bf16.mxu0 0
    %870 = vmatpush1.bf16.msra.mxu0 %v861
    %871 = vmatprep.subr.bf16.mxu0 0
    %872 = vmatpush1.bf16.msra.mxu0 %v862
    %873 = vmatprep.subr.bf16.mxu0 0
    %874 = vmatpush1.bf16.msra.mxu0 %v863
    %875 = vmatprep.subr.bf16.mxu0 0
    %876 = vmatpush1.bf16.msra.mxu0 %v864
    %877 = vmatprep.subr.bf16.mxu0 0
    %878 = vmatpush1.bf16.msra.mxu0 %v865
    %879 = vmatprep.subr.bf16.mxu0 0
    %880 = vmatpush1.bf16.msra.mxu0 %v866
    %881 = vmatprep.subr.bf16.mxu0 0
    %882 = vmatpush1.bf16.msra.mxu0 %v867
    %883 = vmatprep.subr.bf16.mxu0 0
    %884 = vmatpush1.bf16.msra.mxu0 %v868
    %885 = vmatprep.subr.bf16.mxu0 0
    %886 = vmatpush1.bf16.msra.mxu0 0
    %887 = vmatprep.subr.bf16.mxu0 0
    %888 = vmatpush1.bf16.msra.mxu0 0
    %889 = vmatprep.subr.bf16.mxu0 0
    %890 = vmatpush1.bf16.msra.mxu0 0
    %891 = vmatprep.subr.bf16.mxu0 0
    %892 = vmatpush1.bf16.msra.mxu0 0
    %893 = vmatprep.subr.bf16.mxu0 0
    %894 = vmatpush1.bf16.msra.mxu0 0
    %895 = vmatprep.subr.bf16.mxu0 0
    %896 = vmatpush1.bf16.msra.mxu0 0
    %897 = vmatprep.subr.bf16.mxu0 0
    %898 = vmatpush1.bf16.msra.mxu0 0
    %899 = vmatprep.subr.bf16.mxu0 0
    %900 = vmatpush1.bf16.msra.mxu0 0
    %901 = vmatprep.mubr.bf16.mxu0 0
    %902 = vmatmul.mubr.bf16.gmra.mrb[0].mxu0 %v860
    %v903 = vpop.f32.mrb[0].mxu0
    %v904 = vadd.f32 0.0, %v903
    %v905 = vpop.f32.mrb[0].mxu0
    %v906 = vpop.f32.mrb[0].mxu0
    %v907 = vpop.f32.mrb[0].mxu0
    %908 = vdwg.mxu0
    %v909 = vld [vmem:[%s7] sm:$0xff]
    %v910 = vld [vmem:[%s7 + $0x8] sm:$0xff]
    %v911 = vld [vmem:[%s7 + $0x10] sm:$0xff]
    %v912 = vld [vmem:[%s7 + $0x18] sm:$0xff]
    %v913 = vld [vmem:[%s7 + $0x20] sm:$0xff]
    %v914 = vld [vmem:[%s7 + $0x28] sm:$0xff]
    %v915 = vld [vmem:[%s7 + $0x30] sm:$0xff]
    %v916 = vld [vmem:[%s7 + $0x38] sm:$0xff]
    %vm917 = vcmask 523264
    %v919 = vsel %vm917, %v904, 0
    %921 = vmatprep.subr.mxu0 0.0
    %922 = vmatpush1.msra.mxu0 %v909
    %923 = vmatprep.subr.mxu0 0.0
    %924 = vmatpush1.msra.mxu0 %v910
    %925 = vmatprep.subr.mxu0 0.0
    %926 = vmatpush1.msra.mxu0 %v911
    %927 = vmatprep.subr.mxu0 0.0
    %928 = vmatpush1.msra.mxu0 %v912
    %929 = vmatprep.subr.mxu0 0.0
    %930 = vmatpush1.msra.mxu0 %v913
    %931 = vmatprep.subr.mxu0 0.0
    %932 = vmatpush1.msra.mxu0 %v914
    %933 = vmatprep.subr.mxu0 0.0
    %934 = vmatpush1.msra.mxu0 %v915
    %935 = vmatprep.subr.mxu0 0.0
    %936 = vmatpush1.msra.mxu0 %v916
    %937 = vmatprep.subr.mxu0 0.0
    %938 = vmatpush1.msra.mxu0 0.0
    %939 = vmatprep.subr.mxu0 0.0
    %940 = vmatpush1.msra.mxu0 0.0
    %941 = vmatprep.subr.mxu0 0.0
    %942 = vmatpush1.msra.mxu0 0.0
    %943 = vmatprep.subr.mxu0 0.0
    %944 = vmatpush1.msra.mxu0 0.0
    %945 = vmatprep.subr.mxu0 0.0
    %946 = vmatpush1.msra.mxu0 0.0
    %947 = vmatprep.subr.mxu0 0.0
    %948 = vmatpush1.msra.mxu0 0.0
    %949 = vmatprep.subr.mxu0 0.0
    %950 = vmatpush1.msra.mxu0 0.0
    %951 = vmatprep.subr.mxu0 0.0
    %952 = vmatpush1.msra.mxu0 0.0
    %953 = vmatprep.subr.mxu0 0.0
    %954 = vmatpush1.msra.mxu0 0.0
    %955 = vmatprep.subr.mxu0 0.0
    %956 = vmatpush1.msra.mxu0 0.0
    %957 = vmatprep.subr.mxu0 0.0
    %958 = vmatpush1.msra.mxu0 0.0
    %959 = vmatprep.subr.mxu0 0.0
    %960 = vmatpush1.msra.mxu0 0.0
    %961 = vmatprep.subr.mxu0 0.0
    %962 = vmatpush1.msra.mxu0 0.0
    %963 = vmatprep.subr.mxu0 0.0
    %964 = vmatpush1.msra.mxu0 0.0
    %965 = vmatprep.subr.mxu0 0.0
    %966 = vmatpush1.msra.mxu0 0.0
    %967 = vmatprep.subr.mxu0 0.0
    %968 = vmatpush1.msra.mxu0 0.0
    %969 = vmatprep.subr.mxu0 0.0
    %970 = vmatpush1.msra.mxu0 0.0
    %971 = vmatprep.subr.mxu0 0.0
    %972 = vmatpush1.msra.mxu0 0.0
    %973 = vmatprep.subr.mxu0 0.0
    %974 = vmatpush1.msra.mxu0 0.0
    %975 = vmatprep.subr.mxu0 0.0
    %976 = vmatpush1.msra.mxu0 0.0
    %977 = vmatprep.subr.mxu0 0.0
    %978 = vmatpush1.msra.mxu0 0.0
    %979 = vmatprep.subr.mxu0 0.0
    %980 = vmatpush1.msra.mxu0 0.0
    %981 = vmatprep.subr.mxu0 0.0
    %982 = vmatpush1.msra.mxu0 0.0
    %983 = vmatprep.subr.mxu0 0.0
    %984 = vmatpush1.msra.mxu0 0.0
    %985 = vmatprep.mubr.f32.mxu0 0.0
    %986 = vmatmul.mubr.f32.gmra.mrb[0].mxu0 %v919
    %v987 = vpop.f32.mrb[0].mxu0
    %v988 = vadd.f32 0.0, %v987
    %v989 = vpop.f32.mrb[0].mxu0
    %990 = vdwg.mxu0
    %v991 = vld [vmem:[%s8] sm:$0xff]
    %v992 = vld [vmem:[%s8 + $0x8] sm:$0xff]
    %v993 = vld [vmem:[%s8 + $0x10] sm:$0xf]
    %v994 = vld [vmem:[%s9] sm:$0xff]
    %v995 = vld [vmem:[%s9 + $0x8] sm:$0xff]
    %v996 = vld [vmem:[%s9 + $0x10] sm:$0xf]
    %998 = vrot.lane.b32.xlu0 %v988, 127
    %v999 = vpop.permute.xlu0 %998
    %vm1001 = vcmask 64512
    %v1003 = vsel %vm1001, %v994, 0
    %v1006 = vsel %vm1001, %v995, 0
    %v1009 = vsel %vm1001, %v996, 0
    %1011 = vmatprep.subr.mxu0 0.0
    %1012 = vmatpush1.msra.mxu0 %v999
    %1013 = vmatprep.subr.mxu0 0.0
    %1014 = vmatpush1.msra.mxu0 0.0
    %1015 = vmatprep.subr.mxu0 0.0
    %1016 = vmatpush1.msra.mxu0 0.0
    %1017 = vmatprep.subr.mxu0 0.0
    %1018 = vmatpush1.msra.mxu0 0.0
    %1019 = vmatprep.subr.mxu0 0.0
    %1020 = vmatpush1.msra.mxu0 0.0
    %1021 = vmatprep.subr.mxu0 0.0
    %1022 = vmatpush1.msra.mxu0 0.0
    %1023 = vmatprep.subr.mxu0 0.0
    %1024 = vmatpush1.msra.mxu0 0.0
    %1025 = vmatprep.subr.mxu0 0.0
    %1026 = vmatpush1.msra.mxu0 0.0
    %1027 = vmatprep.subr.mxu0 0.0
    %1028 = vmatpush1.msra.mxu0 0.0
    %1029 = vmatprep.subr.mxu0 0.0
    %1030 = vmatpush1.msra.mxu0 0.0
    %1031 = vmatprep.subr.mxu0 0.0
    %1032 = vmatpush1.msra.mxu0 0.0
    %1033 = vmatprep.subr.mxu0 0.0
    %1034 = vmatpush1.msra.mxu0 0.0
    %1035 = vmatprep.subr.mxu0 0.0
    %1036 = vmatpush1.msra.mxu0 0.0
    %1037 = vmatprep.subr.mxu0 0.0
    %1038 = vmatpush1.msra.mxu0 0.0
    %1039 = vmatprep.subr.mxu0 0.0
    %1040 = vmatpush1.msra.mxu0 0.0
    %1041 = vmatprep.subr.mxu0 0.0
    %1042 = vmatpush1.msra.mxu0 0.0
    %1043 = vmatprep.subr.mxu0 0.0
    %1044 = vmatpush1.msra.mxu0 0.0
    %1045 = vmatprep.subr.mxu0 0.0
    %1046 = vmatpush1.msra.mxu0 0.0
    %1047 = vmatprep.subr.mxu0 0.0
    %1048 = vmatpush1.msra.mxu0 0.0
    %1049 = vmatprep.subr.mxu0 0.0
    %1050 = vmatpush1.msra.mxu0 0.0
    %1051 = vmatprep.subr.mxu0 0.0
    %1052 = vmatpush1.msra.mxu0 0.0
    %1053 = vmatprep.subr.mxu0 0.0
    %1054 = vmatpush1.msra.mxu0 0.0
    %1055 = vmatprep.subr.mxu0 0.0
    %1056 = vmatpush1.msra.mxu0 0.0
    %1057 = vmatprep.subr.mxu0 0.0
    %1058 = vmatpush1.msra.mxu0 0.0
    %1059 = vmatprep.subr.mxu0 0.0
    %1060 = vmatpush1.msra.mxu0 0.0
    %1061 = vmatprep.subr.mxu0 0.0
    %1062 = vmatpush1.msra.mxu0 0.0
    %1063 = vmatprep.subr.mxu0 0.0
    %1064 = vmatpush1.msra.mxu0 0.0
    %1065 = vmatprep.subr.mxu0 0.0
    %1066 = vmatpush1.msra.mxu0 0.0
    %1067 = vmatprep.subr.mxu0 0.0
    %1068 = vmatpush1.msra.mxu0 0.0
    %1069 = vmatprep.subr.mxu0 0.0
    %1070 = vmatpush1.msra.mxu0 0.0
    %1071 = vmatprep.subr.mxu0 0.0
    %1072 = vmatpush1.msra.mxu0 0.0
    %1073 = vmatprep.subr.mxu0 0.0
    %1074 = vmatpush1.msra.mxu0 0.0
    %1075 = vmatprep.mubr.f32.mxu0 0.0
    %1076 = vmatmul.mubr.f32.gmra.mrb[0].mxu0 %v1003
    %v1077 = vpop.f32.mrb[0].mxu0
    %v1078 = vadd.f32 0.0, %v1077
    %v1079 = vpop.f32.mrb[0].mxu0
    %1080 = vmatprep.mubr.f32.mxu0 0.0
    %1081 = vmatmul.mubr.f32.gmra.mrb[0].mxu0 %v1006
    %v1082 = vpop.f32.mrb[0].mxu0
    %v1083 = vadd.f32 0.0, %v1082
    %v1084 = vpop.f32.mrb[0].mxu0
    %1085 = vmatprep.mubr.f32.mxu0 0.0
    %1086 = vmatmul.mubr.f32.gmra.mrb[0].mxu0 %v1009
    %v1087 = vpop.f32.mrb[0].mxu0
    %v1088 = vadd.f32 0.0, %v1087
    %v1089 = vpop.f32.mrb[0].mxu0
    %1090 = vdwg.mxu0
    %v1092 = vsel %vm1001, %v991, 0
    %v1095 = vsel %vm1001, %v992, 0
    %v1098 = vsel %vm1001, %v993, 0
    %1100 = vmatprep.subr.mxu0 0.0
    %1101 = vmatpush1.msra.mxu0 %v988
    %1102 = vmatprep.subr.mxu0 0.0
    %1103 = vmatpush1.msra.mxu0 0.0
    %1104 = vmatprep.subr.mxu0 0.0
    %1105 = vmatpush1.msra.mxu0 0.0
    %1106 = vmatprep.subr.mxu0 0.0
    %1107 = vmatpush1.msra.mxu0 0.0
    %1108 = vmatprep.subr.mxu0 0.0
    %1109 = vmatpush1.msra.mxu0 0.0
    %1110 = vmatprep.subr.mxu0 0.0
    %1111 = vmatpush1.msra.mxu0 0.0
    %1112 = vmatprep.subr.mxu0 0.0
    %1113 = vmatpush1.msra.mxu0 0.0
    %1114 = vmatprep.subr.mxu0 0.0
    %1115 = vmatpush1.msra.mxu0 0.0
    %1116 = vmatprep.subr.mxu0 0.0
    %1117 = vmatpush1.msra.mxu0 0.0
    %1118 = vmatprep.subr.mxu0 0.0
    %1119 = vmatpush1.msra.mxu0 0.0
    %1120 = vmatprep.subr.mxu0 0.0
    %1121 = vmatpush1.msra.mxu0 0.0
    %1122 = vmatprep.subr.mxu0 0.0
    %1123 = vmatpush1.msra.mxu0 0.0
    %1124 = vmatprep.subr.mxu0 0.0
    %1125 = vmatpush1.msra.mxu0 0.0
    %1126 = vmatprep.subr.mxu0 0.0
    %1127 = vmatpush1.msra.mxu0 0.0
    %1128 = vmatprep.subr.mxu0 0.0
    %1129 = vmatpush1.msra.mxu0 0.0
    %1130 = vmatprep.subr.mxu0 0.0
    %1131 = vmatpush1.msra.mxu0 0.0
    %1132 = vmatprep.subr.mxu0 0.0
    %1133 = vmatpush1.msra.mxu0 0.0
    %1134 = vmatprep.subr.mxu0 0.0
    %1135 = vmatpush1.msra.mxu0 0.0
    %1136 = vmatprep.subr.mxu0 0.0
    %1137 = vmatpush1.msra.mxu0 0.0
    %1138 = vmatprep.subr.mxu0 0.0
    %1139 = vmatpush1.msra.mxu0 0.0
    %1140 = vmatprep.subr.mxu0 0.0
    %1141 = vmatpush1.msra.mxu0 0.0
    %1142 = vmatprep.subr.mxu0 0.0
    %1143 = vmatpush1.msra.mxu0 0.0
    %1144 = vmatprep.subr.mxu0 0.0
    %1145 = vmatpush1.msra.mxu0 0.0
    %1146 = vmatprep.subr.mxu0 0.0
    %1147 = vmatpush1.msra.mxu0 0.0
    %1148 = vmatprep.subr.mxu0 0.0
    %1149 = vmatpush1.msra.mxu0 0.0
    %1150 = vmatprep.subr.mxu0 0.0
    %1151 = vmatpush1.msra.mxu0 0.0
    %1152 = vmatprep.subr.mxu0 0.0
    %1153 = vmatpush1.msra.mxu0 0.0
    %1154 = vmatprep.subr.mxu0 0.0
    %1155 = vmatpush1.msra.mxu0 0.0
    %1156 = vmatprep.subr.mxu0 0.0
    %1157 = vmatpush1.msra.mxu0 0.0
    %1158 = vmatprep.subr.mxu0 0.0
    %1159 = vmatpush1.msra.mxu0 0.0
    %1160 = vmatprep.subr.mxu0 0.0
    %1161 = vmatpush1.msra.mxu0 0.0
    %1162 = vmatprep.subr.mxu0 0.0
    %1163 = vmatpush1.msra.mxu0 0.0
    %1164 = vmatprep.mubr.f32.mxu0 0.0
    %1165 = vmatmul.mubr.f32.gmra.mrb[0].mxu0 %v1092
    %v1166 = vpop.f32.mrb[0].mxu0
    %v1167 = vadd.f32 %v1078, %v1166
    %v1168 = vpop.f32.mrb[0].mxu0
    %1169 = vmatprep.mubr.f32.mxu0 0.0
    %1170 = vmatmul.mubr.f32.gmra.mrb[0].mxu0 %v1095
    %v1171 = vpop.f32.mrb[0].mxu0
    %v1172 = vadd.f32 %v1083, %v1171
    %v1173 = vpop.f32.mrb[0].mxu0
    %1174 = vmatprep.mubr.f32.mxu0 0.0
    %1175 = vmatmul.mubr.f32.gmra.mrb[0].mxu0 %v1098
    %v1176 = vpop.f32.mrb[0].mxu0
    %v1177 = vadd.f32 %v1088, %v1176
    %v1178 = vpop.f32.mrb[0].mxu0
    %1179 = vdwg.mxu0
    %s1180 = sld [smem:[#allocation2]]
    %v1181 = vstv %s1180
    %v1182 = vadd.f32 %v1167, %v1181
    %v1183 = vadd.f32 %v1172, %v1181
    %v1184 = vadd.f32 %v1177, %v1181
    %v1185 = vxor.u32 %v1182, 2147483648
    %v1186 = vxor.u32 %v1183, 2147483648
    %v1187 = vxor.u32 %v1184, 2147483648
    %v1188 = vmul.f32 %v1185, 1.442695
    %v1189 = vpow.pop %v1188
    %v1190 = vmul.f32 %v1186, 1.442695
    %v1191 = vpow.pop %v1190
    %v1192 = vmul.f32 %v1187, 1.442695
    %v1193 = vpow.pop %v1192
    %v1194 = vadd.f32 %v1189, 1.0
    %v1195 = vadd.f32 %v1191, 1.0
    %v1196 = vadd.f32 %v1193, 1.0
    %v1197 = vrcp.pop %v1194
    %v1198 = vmul.f32 1.0, %v1197
    %v1199 = vrcp.pop %v1195
    %v1200 = vmul.f32 1.0, %v1199
    %v1201 = vrcp.pop %v1196
    %v1202 = vmul.f32 1.0, %v1201
    %vm1203 = vcmask 7168
    %1204 = vst.msk [vmem:[%s11] sm:$0xff] %vm1203, %v1198
    %1205 = vst.msk [vmem:[%s11 + $0x8] sm:$0xff] %vm1203, %v1200
    %vm1206 = vcmask 3072
    %1207 = vst.msk [vmem:[%s11 + $0x10] sm:$0xf] %vm1206, %v1202
    // Predicated region
    $region54: #{tpu_custom_call.1} parent=1 // pred_check
      _
    $region55: #{tpu_custom_call.1} parent=1 // pred_check_branch
      %1209 = sbr.rel (0) target = $region57
    $region56: #{tpu_custom_call.1} parent=1 // pred_region
      _
    $region57: #{tpu_custom_call.1} parent=1 // pred_fallthru
      _
    // Predicated region
    $region58: #{tpu_custom_call.1} parent=1 // pred_check
      _
    $region59: #{tpu_custom_call.1} parent=1 // pred_check_branch
      %1211 = sbr.rel (0) target = $region61
    $region60: #{tpu_custom_call.1} parent=1 // pred_region
      _
    $region61: #{tpu_custom_call.1} parent=1 // pred_fallthru
      _
    %1212 = vsyncpa [#allocation4], 1
    %1213 = vsyncpa [#allocation6], 1

</llo_original>
